<compile_context>
chip_gen: v5e
topology: v5e:2x2
jax: 0.10.0
libtpu: 0.0.40
codegen_flags: <defaults>
</compile_context>

<pallas_src>
import functools

import jax
import jax.numpy as jnp
from jax.experimental import pallas as pl
from jax.experimental.pallas import tpu as pltpu


def _squared_relu_kernel(x_ref, o_ref):
    x = x_ref[...]
    r = jnp.maximum(x, jnp.zeros_like(x))
    o_ref[...] = r * r


def _pick_lanes(total, max_lanes=2048):
    """Largest multiple of 128 that divides `total`, capped at `max_lanes`."""
    cap = min(max_lanes, (total // 128) * 128)
    for cand in range(cap, 0, -128):
        if total % cand == 0:
            return cand
    return 128


@functools.lru_cache(maxsize=None)
def _hw_params():
    """(tile_bytes, vmem_limit_bytes_or_None, num_tensorcores) per TPU generation."""
    kind = ""
    try:
        kind = jax.devices()[0].device_kind.lower()
    except Exception:
        pass

    if "v7" in kind or "tpu7" in kind:
        # 64 MiB VMEM per TC, 2 TCs, ~3.2 TB/s HBM -> larger tiles matter most,
        # but the per-TC VMEM is the binding constraint.
        tile, limit, cores = 7 << 20, 44 << 20, 2
    elif "v6" in kind:
        # 128 MiB VMEM, ~1.4 TB/s HBM.
        tile, limit, cores = 12 << 20, 64 << 20, 1
    elif "v5e" in kind or "v5 lite" in kind or "v5lite" in kind:
        # 128 MiB VMEM, ~0.82 TB/s HBM; default scoped VMEM is only 16 MiB so
        # any tile growth needs the explicit override.
        tile, limit, cores = 6 << 20, 40 << 20, 1
    else:
        # Unknown chip (v4/v5p/interpret/...): keep the proven-safe defaults.
        tile, limit, cores = 2 << 20, None, 1

    # Defensive clamp against the actual per-core VMEM capacity when queryable.
    try:
        vmem_cap = int(pltpu.get_tpu_info().vmem_capacity_bytes)
        tile = min(tile, max(1 << 20, vmem_cap // 8))       # 4x tile resident << cap
        if limit is not None:
            limit = min(limit, (3 * vmem_cap) // 4)
    except Exception:
        pass
    return tile, limit, cores


def _round_up(v, m):
    return -(-v // m) * m


def squared_relu(x):
    """Elementwise relu(x)**2 via a lane-dense tiled Pallas TPU kernel."""
    orig_shape = x.shape
    dtype = x.dtype
    total = int(x.size)
    if total == 0:
        return x

    tile_bytes, vmem_limit, num_tc = _hw_params()

    x1 = x.reshape(-1)  # contiguous flatten: no data movement

    # Rare fallback: element counts that are not a multiple of 128 get a tiny
    # (<= 127 element) pad; allow_input_fusion below lets XLA fuse it into the
    # kernel's input DMA instead of materializing a padded copy.
    pad = (-total) % 128
    if pad:
        x1 = jnp.pad(x1, (0, pad))
    work = total + pad

    lanes = _pick_lanes(work)
    rows = work // lanes
    x2 = x1.reshape(rows, lanes)  # free reshape of a contiguous buffer

    itemsize = jnp.dtype(dtype).itemsize
    sublane = {4: 8, 2: 16, 1: 32}.get(itemsize, 8)
    total_bytes = work * itemsize

    # Max rows per tile from the per-generation VMEM tile budget.
    rows_per_tile = max(sublane, (tile_bytes // (lanes * itemsize)) // sublane * sublane)

    # Minimum number of grid steps: enough for double-buffering (and megacore
    # sharding on 2-TC chips) on medium/large tensors; single step for tiny,
    # latency-bound tensors.
    if total_bytes >= (1 << 20):
        min_blocks = 3 * num_tc
    elif num_tc >= 2 and rows >= 2 * sublane:
        min_blocks = 2  # one block per TensorCore
    else:
        min_blocks = 1

    rows_for_min = _round_up(-(-rows // min_blocks), sublane)
    tile_m = min(rows_per_tile, max(sublane, rows_for_min))
    if tile_m >= rows:
        tile_m = rows  # block equal to the full dim is always a legal shape
    grid_m = -(-rows // tile_m)

    cp_kwargs = dict(dimension_semantics=("parallel",))
    if vmem_limit is not None:
        cp_kwargs["vmem_limit_bytes"] = int(vmem_limit)
    if pad:
        cp_kwargs["allow_input_fusion"] = [True]

    out2 = pl.pallas_call(
        _squared_relu_kernel,
        out_shape=jax.ShapeDtypeStruct((rows, lanes), dtype),
        grid_spec=pltpu.PrefetchScalarGridSpec(
            num_scalar_prefetch=0,
            grid=(grid_m,),
            in_specs=[pl.BlockSpec((tile_m, lanes), lambda i: (i, 0))],
            out_specs=pl.BlockSpec((tile_m, lanes), lambda i: (i, 0)),
        ),
        compiler_params=pltpu.CompilerParams(**cp_kwargs),
        cost_estimate=pl.CostEstimate(
            flops=2 * work,
            transcendentals=0,
            bytes_accessed=2 * work * itemsize,
        ),
    )(x2)

    out1 = out2.reshape(-1)
    if pad:
        out1 = out1[:total]
    return out1.reshape(orig_shape)


if __name__ == "__main__":
    key = jax.random.PRNGKey(0)
    # Small NCHW input consistent with a typical classifier-head usage.
    x = jax.random.normal(key, (2, 4, 16, 16), dtype=jnp.float32)

    y = squared_relu(x)
    jax.block_until_ready(y)

    y_ref = jnp.square(jnp.maximum(x, 0.0))
    assert y.shape == x.shape and y.dtype == x.dtype
    assert jnp.allclose(y, y_ref, atol=1e-6, rtol=1e-6)

    # Extra sanity checks: non-128-divisible count, larger slab, bf16.
    for shape, dt in (((3, 5, 7), jnp.float32),
                      ((8, 256, 256), jnp.float32),
                      ((4, 64, 128), jnp.bfloat16)):
        xi = jax.random.normal(jax.random.PRNGKey(1), shape, dtype=dt)
        yi = squared_relu(xi)
        jax.block_until_ready(yi)
        ri = jnp.square(jnp.maximum(xi, jnp.zeros_like(xi)))
        assert yi.shape == xi.shape and yi.dtype == xi.dtype
        assert jnp.allclose(yi.astype(jnp.float32), ri.astype(jnp.float32),
                            atol=1e-5, rtol=1e-2)

    print("KERNEL_OK")
</pallas_src>

<mosaic_0001>
module attributes {stable_mosaic.version = 11 : i64} {
  func.func @_squared_relu_kernel(%arg0: i32, %arg1: memref<1x2048xf32, #tpu.memory_space<vmem>>, %arg2: memref<1x2048xf32, #tpu.memory_space<vmem>>) attributes {dimension_semantics = [#tpu.dimension_semantics<parallel>], iteration_bounds = array<i64: 1>, scalar_prefetch = 0 : i64, scratch_operands = 0 : i64, tpu.core_type = #tpu.core_type<tc>, window_params = [{transform_indices = @transform_0, window_bounds = array<i64: 1, 2048>}, {transform_indices = @transform_1, window_bounds = array<i64: 1, 2048>}]} {
    %c0 = arith.constant 0 : index
    %c0_0 = arith.constant 0 : index
    %0 = vector.load %arg1[%c0, %c0_0] : memref<1x2048xf32, #tpu.memory_space<vmem>>, vector<1x2048xf32>
    %cst = arith.constant 0.000000e+00 : f32
    %1 = vector.broadcast %cst : f32 to vector<1x2048xf32>
    %2 = arith.maximumf %0, %1 : vector<1x2048xf32>
    %3 = arith.mulf %2, %2 : vector<1x2048xf32>
    %c0_1 = arith.constant 0 : index
    %c0_2 = arith.constant 0 : index
    %4 = vector.load %arg2[%c0_1, %c0_2] : memref<1x2048xf32, #tpu.memory_space<vmem>>, vector<1x2048xf32>
    tpu.vector_store %arg2[%c0_1, %c0_2], %3 {strides = array<i32>} : memref<1x2048xf32, #tpu.memory_space<vmem>>, vector<1x2048xf32>,
    return
  }
  func.func @transform_0(%arg0: i32) -> (i32, i32) {
    %c0_i32 = arith.constant 0 : i32
    %c0_i32_0 = arith.constant 0 : i32
    return %arg0, %c0_i32 : i32, i32
  }
  func.func @transform_1(%arg0: i32) -> (i32, i32) {
    %c0_i32 = arith.constant 0 : i32
    %c0_i32_0 = arith.constant 0 : i32
    return %arg0, %c0_i32 : i32, i32
  }
}

</mosaic_0001>

<llo_original>
// kernel: tpu_custom_call.1
$region0: #{tpu_custom_call.1}
  #allocation0 [shape = 'u32[]', space=smem, size = 0x4, offset = 0x4, fixed_abs, tag = 'smem constant byte address 0x4 - core index']
  #allocation1 [shape = 'u32[72,128]{1,0:T(1,128)}', space=vmem, size = 0x9000, scoped, tag = 'internal scratch']
  %s0 = inlined_call_operand.hbm [shape: f32[1,2048], index: 0, kind: input, shape index: {}]
  %s1 = inlined_call_operand.hbm [shape: f32[1,2048], index: 1, kind: output, shape index: {}]
  %s2 = sld [smem:[#allocation0]]
  $region18: #{tpu_custom_call.1} parent=0
    _
  %s4 = ssub.s32 1, %s2
  %s5 = scalar_select 0, %s4, %s2
  $region1: #{tpu_custom_call.1} parent=0
    #allocation2 [shape = 'u8[8192]{0}', space=vmem, size = 0x2000, scoped, tag = 'input window, operand 0, single buffered']
    #allocation3 [shape = 's32[1]{0}', space=sflag, size = 0x4, scoped, tag = 'scoped memory for tpu_custom_call.1']
    #allocation4 [shape = 's32[1]{0}', space=sflag, size = 0x4, scoped, tag = 'scoped memory for tpu_custom_call.1']
    #allocation5 [shape = 'u8[8192]{0}', space=vmem, size = 0x2000, scoped, tag = 'output window, operand 0, single buffered']
    %6 = vsyncpa [#allocation3], 0
    %7 = vsyncpa [#allocation4], 0
    // Predicated region
    $region2: #{tpu_custom_call.1} parent=1 // pred_check
      _
    $region3: #{tpu_custom_call.1} parent=1 // pred_check_branch
      %9 = sbr.rel (0) target = $region5
    $region4: #{tpu_custom_call.1} parent=1 // pred_region
      %11 = vsyncadd [#allocation3], 0
      %s13 = sshll.u32 %s0, 4
      %s14 = int_to_ptr.hbm [resolvable:$true] %s13
      %s15 = sshll.u32 [#allocation2], 4
      %s16 = int_to_ptr.vmem [resolvable:$true] %s15
      %18 = dma.hbm_to_vmem [thread:$0]  %s14, 256, %s16, [#allocation3]
    $region5: #{tpu_custom_call.1} parent=1 // pred_fallthru
      _
    // Predicated region
    $region6: #{tpu_custom_call.1} parent=1 // pred_check
      _
    $region7: #{tpu_custom_call.1} parent=1 // pred_check_branch
      %20 = sbr.rel (0) target = $region9
    $region8: #{tpu_custom_call.1} parent=1 // pred_region
      %22 = dma.done [#allocation3], 256
    $region9: #{tpu_custom_call.1} parent=1 // pred_fallthru
      _
    %v23 = vld [vmem:[#allocation2] sm:$0xff]
    %v24 = vld [vmem:[#allocation2 + $0x8] sm:$0xff]
    %v25 = vmax.f32 %v23, 0.0
    %v26 = vmax.f32 %v24, 0.0
    %v27 = vmul.f32 %v25, %v25
    %v28 = vmul.f32 %v26, %v26
    %29 = vst [vmem:[#allocation5] sm:$0xff] %v27
    %30 = vst [vmem:[#allocation5 + $0x8] sm:$0xff] %v28
    // Predicated region
    $region10: #{tpu_custom_call.1} parent=1 // pred_check
      _
    $region11: #{tpu_custom_call.1} parent=1 // pred_check_branch
      %32 = sbr.rel (0) target = $region13
    $region12: #{tpu_custom_call.1} parent=1 // pred_region
      %34 = vsyncadd [#allocation4], 0
      %s36 = sshll.u32 [#allocation5], 4
      %s37 = int_to_ptr.vmem [resolvable:$true] %s36
      %s38 = sshll.u32 %s1, 4
      %s39 = int_to_ptr.hbm [resolvable:$true] %s38
      %41 = dma.vmem_to_hbm [thread:$0]  %s37, 256, %s39, [#allocation4]
    $region13: #{tpu_custom_call.1} parent=1 // pred_fallthru
      _
    // Predicated region
    $region14: #{tpu_custom_call.1} parent=1 // pred_check
      _
    $region15: #{tpu_custom_call.1} parent=1 // pred_check_branch
      %43 = sbr.rel (0) target = $region17
    $region16: #{tpu_custom_call.1} parent=1 // pred_region
      %45 = dma.done [#allocation4], 256
    $region17: #{tpu_custom_call.1} parent=1 // pred_fallthru
      _
    %46 = vsyncpa [#allocation3], 1
    %47 = vsyncpa [#allocation4], 1

</llo_original>
